<compile_context>
chip_gen: v7x
topology: tpu7x:2x2x1
jax: 0.10.0
libtpu: 0.0.40
codegen_flags: <defaults>
</compile_context>

<pallas_src>
import functools
import math

import jax
import jax.numpy as jnp
from jax.experimental import pallas as pl
from jax.experimental.pallas import tpu as pltpu


def _vmem_capacity_bytes():
    """Per-TensorCore VMEM capacity; conservative (v7x) fallback if unqueryable."""
    try:
        info = pltpu.get_tpu_info()
        cap = getattr(info, "vmem_capacity_bytes", None)
        if cap:
            return int(cap)
    except Exception:
        pass
    return 64 * 1024 * 1024


_VMEM_CAP = _vmem_capacity_bytes()
# Scoped VMEM limit: 48 MiB on v7x (64 MiB physical), up to 96 MiB on v5e/v6e (128 MiB).
_VMEM_LIMIT_BYTES = min(3 * _VMEM_CAP // 4, 96 * 1024 * 1024)
# Total live bytes we allow one tile to occupy (in/out double-buffers + f32 temps),
# leaving headroom under the scoped limit for compiler scratch.
_VMEM_TILE_BUDGET = 3 * _VMEM_LIMIT_BYTES // 4
# Target input-block size: live footprint is ~7-10x the input block (2x in + 2x out
# double-buffered + ~3 f32 temporaries), so budget/9 keeps us inside the tile budget.
_TARGET_BLOCK_BYTES = min(8 * 1024 * 1024, _VMEM_TILE_BUDGET // 9)


# ---------------------------------------------------------------------------
# Kernels
# ---------------------------------------------------------------------------

def _ln_last_kernel(x_ref, o_ref, *, eps, n):
    """Normalize over the last (lane) axis of a (tile_rows, hidden) block."""
    x = x_ref[...].astype(jnp.float32)
    mean = jnp.mean(x, axis=-1, keepdims=True)
    diff = x - mean
    # Unbiased variance (divide by N-1) to match torch.std's default.
    var = jnp.sum(diff * diff, axis=-1, keepdims=True) * jnp.float32(1.0 / (n - 1))
    std = jnp.sqrt(var) + jnp.float32(eps)
    # One reciprocal per row + broadcast multiply instead of `hidden` divides per row.
    # (approx=True would use the EUP fast path; kept exact to preserve f32 accuracy.)
    inv = pl.reciprocal(std, approx=False)
    o_ref[...] = (diff * inv).astype(o_ref.dtype)


def _ln_mid_kernel(x_ref, o_ref, *, eps, n):
    """Normalize over axis=1 (sublanes) of a (tile_lead, norm, tile_trail) block."""
    x = x_ref[...].astype(jnp.float32)
    mean = jnp.mean(x, axis=1, keepdims=True)
    diff = x - mean
    var = jnp.sum(diff * diff, axis=1, keepdims=True) * jnp.float32(1.0 / (n - 1))
    std = jnp.sqrt(var) + jnp.float32(eps)
    inv = pl.reciprocal(std, approx=False)
    o_ref[...] = (diff * inv).astype(o_ref.dtype)


# ---------------------------------------------------------------------------
# Tile pickers (byte-targeted, cdiv-friendly)
# ---------------------------------------------------------------------------

def _round_down_mult(v, m):
    return (v // m) * m


def _pick_tile_rows(rows, hidden, itemsize):
    """Row tile for the last-dim kernel: multiple of 8 (or full extent), sized so
    the input block is ~_TARGET_BLOCK_BYTES, the live set fits the VMEM budget,
    and the grid keeps >= ~8 steps when rows allow (pipeline depth / megacore)."""
    if rows <= 8:
        return rows
    in_per_row = max(hidden * itemsize, 1)
    live_per_row = max(hidden * (4 * itemsize + 12), 1)  # 2x in + 2x out + ~3 f32 temps
    t = min(max(_TARGET_BLOCK_BYTES // in_per_row, 1),
            max(_VMEM_TILE_BUDGET // live_per_row, 1))
    t = min(t, pl.cdiv(rows, 8))          # >= ~8 grid steps (>= 4 per v7x TC)
    t = max(8, _round_down_mult(t, 8))    # sublane-legal; last block may be partial
    if t >= rows:
        return rows                       # full extent is always legal
    return t


def _pick_tiles_mid(lead, norm, trail, itemsize):
    """(tile_lead, tile_trail) for the interior-dim kernel. tile_trail is the full
    trailing extent or a multiple of 128; tile_lead has no (8,128) constraint."""
    col_in = max(norm * itemsize, 1)                 # input bytes per (lead, trail) column
    col_live = max(norm * (4 * itemsize + 12), 1)
    if trail * col_in <= _TARGET_BLOCK_BYTES and trail * col_live <= _VMEM_TILE_BUDGET:
        t_trail = trail
    else:
        t = min(max(_TARGET_BLOCK_BYTES // col_in, 1),
                max(_VMEM_TILE_BUDGET // col_live, 1))
        t = max(128, _round_down_mult(t, 128))
        t_trail = trail if t >= trail else t

    in_per_lead = max(norm * t_trail * itemsize, 1)
    live_per_lead = max(norm * t_trail * (4 * itemsize + 12), 1)
    if lead <= 1:
        return 1, t_trail
    t = min(max(_TARGET_BLOCK_BYTES // in_per_lead, 1),
            max(_VMEM_TILE_BUDGET // live_per_lead, 1))
    t = max(1, min(t, pl.cdiv(lead, 4)))  # keep some grid depth on the lead axis too
    t_lead = lead if t >= lead else t
    return t_lead, t_trail


# ---------------------------------------------------------------------------
# pallas_call wrappers
# ---------------------------------------------------------------------------

def _layernorm_lastdim(x, eps):
    rows, hidden = x.shape
    assert hidden > 1, "unbiased std (N-1) needs at least 2 elements along dim"
    tile_rows = _pick_tile_rows(rows, hidden, x.dtype.itemsize)
    grid = (pl.cdiv(rows, tile_rows),)
    # With < 8 steps a 2-way megacore split would leave each core unpipelined.
    sem = "parallel" if grid[0] >= 8 else "arbitrary"
    return pl.pallas_call(
        functools.partial(_ln_last_kernel, eps=eps, n=hidden),
        out_shape=jax.ShapeDtypeStruct((rows, hidden), x.dtype),
        grid_spec=pltpu.PrefetchScalarGridSpec(
            num_scalar_prefetch=0,
            grid=grid,
            in_specs=[pl.BlockSpec((tile_rows, hidden), lambda i: (i, 0))],
            out_specs=pl.BlockSpec((tile_rows, hidden), lambda i: (i, 0)),
        ),
        compiler_params=pltpu.CompilerParams(
            dimension_semantics=(sem,),
            vmem_limit_bytes=_VMEM_LIMIT_BYTES,
        ),
    )(x)


def _layernorm_middim(x, eps):
    lead, norm, trail = x.shape
    assert norm > 1, "unbiased std (N-1) needs at least 2 elements along dim"
    tile_lead, tile_trail = _pick_tiles_mid(lead, norm, trail, x.dtype.itemsize)
    grid = (pl.cdiv(lead, tile_lead), pl.cdiv(trail, tile_trail))
    sem = "parallel" if grid[0] * grid[1] >= 8 else "arbitrary"
    return pl.pallas_call(
        functools.partial(_ln_mid_kernel, eps=eps, n=norm),
        out_shape=jax.ShapeDtypeStruct((lead, norm, trail), x.dtype),
        grid_spec=pltpu.PrefetchScalarGridSpec(
            num_scalar_prefetch=0,
            grid=grid,
            in_specs=[pl.BlockSpec((tile_lead, norm, tile_trail),
                                   lambda i, j: (i, 0, j))],
            out_specs=pl.BlockSpec((tile_lead, norm, tile_trail),
                                   lambda i, j: (i, 0, j)),
        ),
        compiler_params=pltpu.CompilerParams(
            dimension_semantics=(sem, sem),
            vmem_limit_bytes=_VMEM_LIMIT_BYTES,
        ),
    )(x)


def layernorm(x, dim=-1, eps=1e-05):
    """(x - mean) / (unbiased_std + eps) over `dim`, matching the PyTorch module."""
    nd = x.ndim
    dim = dim % nd
    if nd == 1:
        return _layernorm_lastdim(x[None, :], eps)[0]
    shape = x.shape
    if dim == nd - 1:
        rows = math.prod(shape[:-1])
        return _layernorm_lastdim(x.reshape(rows, shape[-1]), eps).reshape(shape)
    # Interior / leading dim: collapse to (lead, norm, trail) with reshapes only
    # (no HBM transpose); reduce over the middle (sublane) axis in-kernel.
    lead = math.prod(shape[:dim])
    norm = shape[dim]
    trail = math.prod(shape[dim + 1:])
    out = _layernorm_middim(x.reshape(lead, norm, trail), eps)
    return out.reshape(shape)


# ---------------------------------------------------------------------------
# Self-test
# ---------------------------------------------------------------------------

if __name__ == "__main__":
    key = jax.random.PRNGKey(0)
    k1, k2, k3 = jax.random.split(key, 3)

    def ref_ln(x, dim, eps):
        x = x.astype(jnp.float32)
        mean = jnp.mean(x, axis=dim, keepdims=True)
        std = jnp.std(x, axis=dim, keepdims=True, ddof=1) + eps
        return (x - mean) / std

    # Case 1: 4-D activations, normalize over the last dim (lane-axis reduce path).
    x1 = jax.random.normal(k1, (2, 4, 16, 16), dtype=jnp.float32)
    out1 = jax.block_until_ready(layernorm(x1, dim=-1, eps=1e-05))
    assert jnp.allclose(out1, ref_ln(x1, -1, 1e-05), atol=1e-5, rtol=1e-4), \
        "mismatch vs reference (dim=-1)"

    # Case 2: interior dim (transpose-free sublane-reduce path).
    x2 = jax.random.normal(k2, (2, 8, 16), dtype=jnp.float32)
    out2 = jax.block_until_ready(layernorm(x2, dim=1, eps=1e-05))
    assert jnp.allclose(out2, ref_ln(x2, 1, 1e-05), atol=1e-5, rtol=1e-4), \
        "mismatch vs reference (dim=1)"

    # Case 3: row count not a multiple of the tile (exercises cdiv grid + padded last block).
    x3 = jax.random.normal(k3, (3, 50, 256), dtype=jnp.float32)
    out3 = jax.block_until_ready(layernorm(x3, dim=-1, eps=1e-05))
    assert jnp.allclose(out3, ref_ln(x3, -1, 1e-05), atol=1e-5, rtol=1e-4), \
        "mismatch vs reference (partial last block)"

    # Case 4: bf16 I/O, f32 in-kernel compute.
    x4 = jax.random.normal(k1, (2, 4, 16, 16), dtype=jnp.bfloat16)
    out4 = jax.block_until_ready(layernorm(x4, dim=-1, eps=1e-05))
    assert jnp.allclose(out4.astype(jnp.float32), ref_ln(x4, -1, 1e-05),
                        atol=5e-2, rtol=5e-2), "mismatch vs reference (bf16)"

    print("KERNEL_OK")
</pallas_src>

<mosaic_0001>
module attributes {stable_mosaic.version = 11 : i64} {
  func.func @_ln_last_kernel(%arg0: i32, %arg1: memref<16x16xf32, #tpu.memory_space<vmem>>, %arg2: memref<16x16xf32, #tpu.memory_space<vmem>>) attributes {dimension_semantics = [#tpu.dimension_semantics<parallel>], iteration_bounds = array<i64: 8>, scalar_prefetch = 0 : i64, scratch_operands = 0 : i64, tpu.core_type = #tpu.core_type<tc>, window_params = [{transform_indices = @transform_0, window_bounds = array<i64: 16, 16>}, {transform_indices = @transform_1, window_bounds = array<i64: 16, 16>}]} {
    %c0 = arith.constant 0 : index
    %c0_0 = arith.constant 0 : index
    %0 = vector.load %arg1[%c0, %c0_0] : memref<16x16xf32, #tpu.memory_space<vmem>>, vector<16x16xf32>
    %cst = arith.constant dense<0.000000e+00> : vector<16xf32>
    %1 = vector.multi_reduction <add>, %0, %cst [1] : vector<16x16xf32> to vector<16xf32>
    %2 = vector.shape_cast %1 : vector<16xf32> to vector<16x1xf32>
    %cst_1 = arith.constant 1.600000e+01 : f32
    %3 = vector.broadcast %cst_1 : f32 to vector<16x1xf32>
    %4 = arith.divf %2, %3 : vector<16x1xf32>
    %5 = vector.broadcast %4 : vector<16x1xf32> to vector<16x16xf32>
    %6 = arith.subf %0, %5 : vector<16x16xf32>
    %7 = arith.mulf %6, %6 : vector<16x16xf32>
    %cst_2 = arith.constant dense<0.000000e+00> : vector<16xf32>
    %8 = vector.multi_reduction <add>, %7, %cst_2 [1] : vector<16x16xf32> to vector<16xf32>
    %9 = vector.shape_cast %8 : vector<16xf32> to vector<16x1xf32>
    %cst_3 = arith.constant 0.0666666701 : f32
    %10 = vector.broadcast %cst_3 : f32 to vector<16x1xf32>
    %11 = arith.mulf %9, %10 : vector<16x1xf32>
    %12 = math.sqrt %11 : vector<16x1xf32>
    %cst_4 = arith.constant 9.99999974E-6 : f32
    %13 = vector.broadcast %cst_4 : f32 to vector<16x1xf32>
    %14 = arith.addf %12, %13 : vector<16x1xf32>
    %15 = tpu.reciprocal %14 : vector<16x1xf32> -> vector<16x1xf32>
    %16 = vector.broadcast %15 : vector<16x1xf32> to vector<16x16xf32>
    %17 = arith.mulf %6, %16 : vector<16x16xf32>
    %c0_5 = arith.constant 0 : index
    %c0_6 = arith.constant 0 : index
    %18 = vector.load %arg2[%c0_5, %c0_6] : memref<16x16xf32, #tpu.memory_space<vmem>>, vector<16x16xf32>
    tpu.vector_store %arg2[%c0_5, %c0_6], %17 {strides = array<i32>} : memref<16x16xf32, #tpu.memory_space<vmem>>, vector<16x16xf32>,
    return
  }
  func.func @transform_0(%arg0: i32) -> (i32, i32) {
    %c0_i32 = arith.constant 0 : i32
    %c0_i32_0 = arith.constant 0 : i32
    return %arg0, %c0_i32 : i32, i32
  }
  func.func @transform_1(%arg0: i32) -> (i32, i32) {
    %c0_i32 = arith.constant 0 : i32
    %c0_i32_0 = arith.constant 0 : i32
    return %arg0, %c0_i32 : i32, i32
  }
}

</mosaic_0001>

<llo_original>
// kernel: tpu_custom_call.1
$region0: #{tpu_custom_call.1}
  #allocation0 [shape = 'u32[]', space=smem, size = 0x4, offset = 0x4, fixed_abs, tag = 'smem constant byte address 0x4 - core index']
  #allocation1 [shape = 'u32[144,128]{1,0:T(1,128)}', space=vmem, size = 0x12000, scoped, tag = 'internal scratch']
  %s0 = inlined_call_operand.vmem [shape: f32[128,16], index: 0, kind: input, shape index: {}]
  %s1 = inlined_call_operand.vmem [shape: f32[128,16], index: 1, kind: output, shape index: {}]
  %s2 = sld [smem:[#allocation0]]
  $region37: #{tpu_custom_call.1} parent=0
    _
  %s4 = ssub.s32 1, %s2
  %s5 = scalar_select 0, %s4, %s2
  loop: start=0, step=1, limit=10
  $region2: #{tpu_custom_call.1} parent=0 // loop_pre_header
    _
  $region3: #{tpu_custom_call.1} parent=0 // loop_header
    %s7 = sphi 0, %s11
    %p8 = scmp.ge.s32.totalorder %s7, 10
    %s17 = sphi 0, %s19
    %s20 = sphi 0, %s17
    %s21 = sphi 0, %s20
    %s37 = sphi 0, %s21
    %s43 = sphi 0, %s45
    %s46 = sphi 0, %s43
    %s47 = sphi 0, %s46
    %s63 = sphi 0, %s47
  $region4: #{tpu_custom_call.1} parent=0 // loop_header_branch
    %10 = sbr.rel (%p8) target = $region8
  $region5: #{tpu_custom_call.1} parent=0 // loop_body
    %s12 = ssub.s32 %s7, 1
    %s13 = ssub.s32 %s7, 2
    %s14 = sadd.s32 %s7, 1
    %s15 = ssub.s32 %s7, %s14
    %p16 = scmp.eq.s32.totalorder %s15, 0
    %s18 = sadd.s32 %s17, 1
    %s19 = scalar_select %p16, %s17, %s18
    %p22 = pneg %p16
    %p23 = scmp.eq.s32.totalorder %s7, 7
    %p24 = por %p22, %p23
    %p25 = scmp.ne.s32.totalorder %s17, %s20
    %p26 = scmp.eq.s32.totalorder %s7, 0
    %p27 = por %p25, %p26
    %p28 = scmp.ne.s32.totalorder %s17, %s20
    %p29 = scmp.eq.s32.totalorder %s12, 7
    %p30 = por %p28, %p29
    %p31 = scmp.ne.s32.totalorder %s20, %s21
    %p32 = scmp.eq.s32.totalorder %s12, 0
    %p33 = por %p31, %p32
    %p34 = scmp.ne.s32.totalorder %s20, %s21
    %p35 = scmp.eq.s32.totalorder %s13, 7
    %p36 = por %p34, %p35
    %p38 = scmp.ne.s32.totalorder %s21, %s37
    %p39 = scmp.eq.s32.totalorder %s13, 0
    %p40 = por %p38, %p39
    %s41 = ssub.s32 %s7, %s14
    %p42 = scmp.eq.s32.totalorder %s41, 0
    %s44 = sadd.s32 %s43, 1
    %s45 = scalar_select %p42, %s43, %s44
    %p48 = pneg %p42
    %p49 = scmp.eq.s32.totalorder %s7, 7
    %p50 = por %p48, %p49
    %p51 = scmp.ne.s32.totalorder %s43, %s46
    %p52 = scmp.eq.s32.totalorder %s7, 0
    %p53 = por %p51, %p52
    %p54 = scmp.ne.s32.totalorder %s43, %s46
    %p55 = scmp.eq.s32.totalorder %s12, 7
    %p56 = por %p54, %p55
    %p57 = scmp.ne.s32.totalorder %s46, %s47
    %p58 = scmp.eq.s32.totalorder %s12, 0
    %p59 = por %p57, %p58
    %p60 = scmp.ne.s32.totalorder %s46, %s47
    %p61 = scmp.eq.s32.totalorder %s13, 7
    %p62 = por %p60, %p61
    %p64 = scmp.ne.s32.totalorder %s47, %s63
    %p65 = scmp.eq.s32.totalorder %s13, 0
    %p66 = por %p64, %p65
    %p67 = scmp.le.s32.totalorder 1, %s7
    %p68 = scmp.lt.s32.totalorder %s7, 9
    %p69 = pnand %p67, %p68
    %p70 = pneg %p69
    // Predicated region
    $region9: #{tpu_custom_call.1} parent=5 // pred_check
      _
    $region10: #{tpu_custom_call.1} parent=5 // pred_check_branch
      %72 = sbr.rel (%p69) target = $region12
    $region11: #{tpu_custom_call.1} parent=5 // pred_region
      %s73 = ssub.s32 %s7, 1
    $region12: #{tpu_custom_call.1} parent=5 // pred_fallthru
      _
    %p74 = scmp.lt.s32.totalorder %s7, 8
    // Predicated region
    $region13: #{tpu_custom_call.1} parent=5 // pred_check
      %p75 = pneg %p74
    $region14: #{tpu_custom_call.1} parent=5 // pred_check_branch
      %77 = sbr.rel (%p75) target = $region16
    $region15: #{tpu_custom_call.1} parent=5 // pred_region
      // Predicated region
      $region17: #{tpu_custom_call.1} parent=15 // pred_check
        %p78 = pneg %p27
      $region18: #{tpu_custom_call.1} parent=15 // pred_check_branch
        %80 = sbr.rel (%p78) target = $region20
      $region19: #{tpu_custom_call.1} parent=15 // pred_region
        %s81 = smul.u32 2, %s7
        %p82 = scmp.lt.s32.totalorder %s81, 15
        %s83 = scalar_select %p82, %s81, 15
        %s84 = smul.addr %s83, 8
        %s85 = scalar_lea.vmem %s0, %s84
        %s86 = smul.u32 2, %s7
      $region20: #{tpu_custom_call.1} parent=15 // pred_fallthru
        _
    $region16: #{tpu_custom_call.1} parent=5 // pred_fallthru
      _
    %p87 = scmp.le.s32.totalorder 1, %s7
    %p88 = scmp.lt.s32.totalorder %s7, 9
    %p89 = pnand %p87, %p88
    %p90 = pneg %p89
    // Predicated region
    $region21: #{tpu_custom_call.1} parent=5 // pred_check
      _
    $region22: #{tpu_custom_call.1} parent=5 // pred_check_branch
      %92 = sbr.rel (%p89) target = $region24
    $region23: #{tpu_custom_call.1} parent=5 // pred_region
      %s93 = ssub.s32 %s7, 1
      %s94 = smul.u32 2, %s12
      %p95 = scmp.lt.s32.totalorder %s94, 15
      %s96 = scalar_select %p95, %s94, 15
      %s97 = smul.addr %s96, 8
      %s98 = scalar_lea.vmem %s0, %s97
      %p99 = pneg %p33
      %p100 = pneg %p30
      %p101 = pneg %p59
      %p102 = pneg %p56
      %s103 = smul.u32 2, %s12
      %p104 = scmp.lt.s32.totalorder %s103, 15
      %s105 = scalar_select %p104, %s103, 15
      %s106 = smul.addr %s105, 8
      %s107 = scalar_lea.vmem %s1, %s106
      %s108 = smul.u32 2, %s12
      %p109 = scmp.lt.s32.totalorder %s108, 15
      %s110 = scalar_select %p109, %s108, 15
      %s111 = smul.addr %s110, 8
      %s112 = scalar_lea.vmem %s0, %s111
      %s113 = smul.u32 2, %s12
      %s114 = smul.u32 2, %s12
      %p115 = scmp.lt.s32.totalorder %s114, 15
      %s116 = scalar_select %p115, %s114, 15
      %s117 = smul.addr %s116, 8
      %s118 = scalar_lea.vmem %s1, %s117
      %s119 = smul.u32 2, %s12
      %v120 = vld [vmem:[%s112] sm:$0xff]
      %v121 = vld [vmem:[%s112 + $0x8] sm:$0xff]
      %vm122 = vcmask 130048
      %v123 = vsel %vm122, %v120, 0.0
      %124 = vadd.xlane.f32.xlu0 %v123
      %v125 = vpop.xlane.xlu0 %124
      %v126 = vsel %vm122, %v121, 0.0
      %127 = vadd.xlane.f32.xlu0 %v126
      %v128 = vpop.xlane.xlu0 %127
      %v129 = vrcp.pop 16.0
      %v130 = vmul.f32 %v125, %v129
      %v131 = vmul.f32 %v128, %v129
      %v132 = vsub.f32 %v120, %v130
      %v133 = vsub.f32 %v121, %v131
      %v134 = vmul.f32 %v132, %v132
      %v135 = vmul.f32 %v133, %v133
      %v136 = vsel %vm122, %v134, 0.0
      %137 = vadd.xlane.f32.xlu0 %v136
      %v138 = vpop.xlane.xlu0 %137
      %v139 = vsel %vm122, %v135, 0.0
      %140 = vadd.xlane.f32.xlu0 %v139
      %v141 = vpop.xlane.xlu0 %140
      %v142 = vmul.f32 %v138, 0.06666667
      %v143 = vmul.f32 %v141, 0.06666667
      %v144 = vrsqrt.pop %v142
      %v145 = vmul.f32 %v142, %v144
      %vm146 = vcmp.eq.f32.partialorder %v142, inf
      %v147 = vsel %vm146, %v142, %v145
      %vm148 = vcmp.eq.f32.partialorder %v142, 0.0
      %v149 = vand.u32 %v142, 2147483648
      %v150 = vsel %vm148, %v149, %v147
      %v151 = vrsqrt.pop %v143
      %v152 = vmul.f32 %v143, %v151
      %vm153 = vcmp.eq.f32.partialorder %v143, inf
      %v154 = vsel %vm153, %v143, %v152
      %vm155 = vcmp.eq.f32.partialorder %v143, 0.0
      %v156 = vand.u32 %v143, 2147483648
      %v157 = vsel %vm155, %v156, %v154
      %v158 = vadd.f32 %v150, 1e-05
      %v159 = vadd.f32 %v157, 1e-05
      %v160 = vrcp.pop %v158
      %v161 = vrcp.pop %v159
      %v162 = vmul.f32 %v132, %v160
      %v163 = vmul.f32 %v133, %v161
      %164 = vst.msk [vmem:[%s118] sm:$0xff] %vm122, %v162
      %165 = vst.msk [vmem:[%s118 + $0x8] sm:$0xff] %vm122, %v163
      %s166 = smul.u32 2, %s12
      %p167 = scmp.lt.s32.totalorder %s166, 15
      %s168 = scalar_select %p167, %s166, 15
      %s169 = smul.addr %s168, 8
      %s170 = scalar_lea.vmem %s1, %s169
      // Predicated region
      $region25: #{tpu_custom_call.1} parent=23 // pred_check
        %p171 = pneg %p56
      $region26: #{tpu_custom_call.1} parent=23 // pred_check_branch
        %173 = sbr.rel (%p171) target = $region28
      $region27: #{tpu_custom_call.1} parent=23 // pred_region
        %s174 = smul.u32 2, %s12
      $region28: #{tpu_custom_call.1} parent=23 // pred_fallthru
        _
    $region24: #{tpu_custom_call.1} parent=5 // pred_fallthru
      _
    %p175 = scmp.le.s32.totalorder 2, %s7
    // Predicated region
    $region29: #{tpu_custom_call.1} parent=5 // pred_check
      %p176 = pneg %p175
    $region30: #{tpu_custom_call.1} parent=5 // pred_check_branch
      %178 = sbr.rel (%p176) target = $region32
    $region31: #{tpu_custom_call.1} parent=5 // pred_region
      %s179 = ssub.s32 %s7, 2
      // Predicated region
      $region33: #{tpu_custom_call.1} parent=31 // pred_check
        %p180 = pneg %p62
      $region34: #{tpu_custom_call.1} parent=31 // pred_check_branch
        %182 = sbr.rel (%p180) target = $region36
      $region35: #{tpu_custom_call.1} parent=31 // pred_region
        %s183 = smul.u32 2, %s13
        %p184 = scmp.lt.s32.totalorder %s183, 15
        %s185 = scalar_select %p184, %s183, 15
        %s186 = smul.addr %s185, 8
        %s187 = scalar_lea.vmem %s1, %s186
      $region36: #{tpu_custom_call.1} parent=31 // pred_fallthru
        _
    $region32: #{tpu_custom_call.1} parent=5 // pred_fallthru
      _
  $region6: #{tpu_custom_call.1} parent=0 // loop_footer
    %s11 = sadd.s32 1, %s7
  $region7: #{tpu_custom_call.1} parent=0 // loop_footer_branch
    %6 = sbr.rel target = $region3
  $region8: #{tpu_custom_call.1} parent=0 // loop_exit
    _

</llo_original>
